<compile_context>
chip_gen: v7x
topology: tpu7x:2x2x1
jax: 0.10.0
libtpu: 0.0.40
codegen_flags: <defaults>
</compile_context>

<pallas_src>
import functools

import jax
import jax.numpy as jnp
from jax.experimental import pallas as pl
from jax.experimental.pallas import tpu as pltpu

BN_EPS = 1e-5
LANE = 128
SUB = 8


def _round_up(n, m):
    return ((n + m - 1) // m) * m


# --------------------------------------------------------------------------- #
# One-time parameter preparation (NOT in the per-call hot path)                #
# --------------------------------------------------------------------------- #
def fold_params(params, *, compute_dtype=jnp.float32):
    """Fold eval-mode BN into fc1, collapse the ensemble mean into the weights,
    and pack everything into a single lane-dense (rows, L) f32/bf16 slab:

        rows [0, Dp)              : W1'  (D x Hp), BN scale folded in
        row  Dp                   : b1'  (1 x Hp), BN shift folded in
        rows [Dp+8, Dp+8+Hp)      : W2   (Hp x Op), 1/num_nets folded in
        row  Dp+8+Hp              : mean_n(b2) (1 x Op)

    Zero padding (Hp = pad(N*H,128), Op = pad(O,128)) is harmless because
    ReLU(0+0)=0 and the matching W2 rows / output lanes are zero.
    """
    w1_t, b1, gamma, beta, rmean, rvar, w2_t, b2 = params
    num_nets, D, H = w1_t.shape
    O = w2_t.shape[-1]

    # Fold eval-mode BatchNorm into fc1.
    scale = gamma * jax.lax.rsqrt(rvar + BN_EPS)             # (N, 1, H)
    w1f = w1_t * scale                                       # (N, D, H)
    b1f = (b1 - rmean) * scale + beta                        # (N, 1, H)

    NH = num_nets * H
    Hp = _round_up(NH, LANE)                                 # lane-dense hidden slab
    Op = _round_up(O, LANE)                                  # lane-dense output slab
    Dp = _round_up(D, SUB)                                   # sublane-aligned K
    L = max(Hp, Op)

    W1 = jnp.transpose(w1f, (1, 0, 2)).reshape(D, NH)        # (D, N*H)
    B1 = b1f.reshape(NH)                                     # (N*H,)
    W2 = w2_t.reshape(NH, O) * (1.0 / num_nets)              # mean folded into W2
    B2 = jnp.mean(b2, axis=0).reshape(O)                     # (O,)

    rows = Dp + SUB + Hp + SUB
    slab = jnp.zeros((rows, L), jnp.float32)
    slab = slab.at[:D, :NH].set(W1)
    slab = slab.at[Dp, :NH].set(B1)
    slab = slab.at[Dp + SUB:Dp + SUB + NH, :O].set(W2)
    slab = slab.at[Dp + SUB + Hp, :O].set(B2)
    slab = slab.astype(compute_dtype)

    meta = dict(D=D, Dp=Dp, H=H, Hp=Hp, O=O, Op=Op, L=L,
                rows=rows, num_nets=num_nets)
    return slab, meta


# --------------------------------------------------------------------------- #
# Kernel                                                                       #
# --------------------------------------------------------------------------- #
def _make_kernel(Dp, Hp, Op):
    r_b1 = Dp
    r_w2 = Dp + SUB
    r_b2 = Dp + SUB + Hp

    def kernel(x_ref, p_ref, o_ref):
        cd = p_ref.dtype
        x = x_ref[...].astype(cd)                                       # (TB, Dp)
        w1 = p_ref[0:Dp, 0:Hp]                                          # (Dp, Hp)
        h = jnp.dot(x, w1, preferred_element_type=jnp.float32)          # (TB, Hp)
        h = h + p_ref[r_b1:r_b1 + 1, 0:Hp].astype(jnp.float32)          # folded-BN bias
        h = jnp.maximum(h, 0.0).astype(cd)                              # ReLU
        w2 = p_ref[r_w2:r_w2 + Hp, 0:Op]                                # (Hp, Op)
        out = jnp.dot(h, w2, preferred_element_type=jnp.float32)        # (TB, Op)
        o_ref[...] = out + p_ref[r_b2:r_b2 + 1, 0:Op].astype(jnp.float32)

    return kernel


# --------------------------------------------------------------------------- #
# Forward wrapper                                                              #
# --------------------------------------------------------------------------- #
def ensemble_forward(x, slab, meta, *, block_b=128):
    """Mean over ensemble members of each MLP's output (mean=True path)."""
    B, D = x.shape
    Dp, Hp, O, Op, L, rows = (meta["Dp"], meta["Hp"], meta["O"],
                              meta["Op"], meta["L"], meta["rows"])
    assert D == meta["D"], "input feature dim mismatch"

    if Dp != D:  # sublane-align the contraction dim (no-op when D % 8 == 0)
        x = jnp.pad(x, ((0, 0), (0, Dp - D)))

    kernel = _make_kernel(Dp, Hp, Op)
    itemsize = jnp.dtype(slab.dtype).itemsize
    cost = pl.CostEstimate(
        flops=2 * B * (Dp * Hp + Hp * Op),
        transcendentals=0,
        bytes_accessed=x.size * 4 + slab.size * itemsize + B * Op * 4,
    )

    if B % block_b == 0 and B // block_b >= 2:
        # Gridded batch path: weights stay VMEM-resident, batch tiles pipeline,
        # "parallel" semantics lets v7x shard the batch axis across both TCs.
        out = pl.pallas_call(
            kernel,
            out_shape=jax.ShapeDtypeStruct((B, Op), jnp.float32),
            grid=(B // block_b,),
            in_specs=[pl.BlockSpec((block_b, Dp), lambda i: (i, 0)),
                      pl.BlockSpec((rows, L), lambda i: (0, 0))],
            out_specs=pl.BlockSpec((block_b, Op), lambda i: (i, 0)),
            compiler_params=pltpu.CompilerParams(
                dimension_semantics=("parallel",)),
            cost_estimate=cost,
        )(x, slab)
    else:
        # Small-batch path: single step, two input DMAs, one dense output store.
        vmem = pl.BlockSpec(memory_space=pltpu.MemorySpace.VMEM)
        out = pl.pallas_call(
            kernel,
            out_shape=jax.ShapeDtypeStruct((B, Op), jnp.float32),
            in_specs=[vmem, vmem],
            out_specs=vmem,
            cost_estimate=cost,
        )(x, slab)

    return out[:, :O]  # drop lane padding (fold into downstream consumer if possible)


# --------------------------------------------------------------------------- #
# Parameters + pure-JAX reference                                              #
# --------------------------------------------------------------------------- #
def make_params(key, num_nets, input_dims, hidden_dims, output_dims):
    ks = jax.random.split(key, 8)
    w1_t = 0.1 * jax.random.normal(ks[0], (num_nets, input_dims, hidden_dims), jnp.float32)
    b1 = 0.1 * jax.random.normal(ks[1], (num_nets, 1, hidden_dims), jnp.float32)
    gamma = 1.0 + 0.1 * jax.random.normal(ks[2], (num_nets, 1, hidden_dims), jnp.float32)
    beta = 0.1 * jax.random.normal(ks[3], (num_nets, 1, hidden_dims), jnp.float32)
    rmean = 0.1 * jax.random.normal(ks[4], (num_nets, 1, hidden_dims), jnp.float32)
    rvar = jnp.abs(1.0 + 0.1 * jax.random.normal(ks[5], (num_nets, 1, hidden_dims), jnp.float32))
    w2_t = 0.1 * jax.random.normal(ks[6], (num_nets, hidden_dims, output_dims), jnp.float32)
    b2 = 0.1 * jax.random.normal(ks[7], (num_nets, 1, output_dims), jnp.float32)
    return (w1_t, b1, gamma, beta, rmean, rvar, w2_t, b2)


def reference_forward(x, params):
    """Un-folded, per-net reference matching the PyTorch module (eval-mode BN)."""
    w1_t, b1, gamma, beta, rmean, rvar, w2_t, b2 = params
    h = jnp.einsum("bd,ndh->nbh", x, w1_t) + b1              # (N, B, H)
    h = (h - rmean) * jax.lax.rsqrt(rvar + BN_EPS) * gamma + beta
    h = jnp.maximum(h, 0.0)
    out = jnp.einsum("nbh,nho->nbo", h, w2_t) + b2           # (N, B, O)
    return jnp.mean(out, axis=0)                             # (B, O)


# --------------------------------------------------------------------------- #
if __name__ == "__main__":
    key = jax.random.PRNGKey(0)
    kx, kx2, kp = jax.random.split(key, 3)

    batch = 8
    input_dims, hidden_dims, output_dims = 32, 32, 4
    num_nets = 3

    x = jax.random.normal(kx, (batch, input_dims), jnp.float32)
    params = make_params(kp, num_nets, input_dims, hidden_dims, output_dims)

    # --- f32 path, small batch (single-step kernel) -------------------------
    slab, meta = fold_params(params)                  # one-time, outside hot path
    fwd = jax.jit(functools.partial(ensemble_forward, meta=meta))
    out = jax.block_until_ready(fwd(x, slab))
    ref = reference_forward(x, params)
    assert out.shape == (batch, output_dims)
    assert jnp.allclose(out, ref, atol=1e-5, rtol=1e-5), "f32 small-batch mismatch"

    # --- f32 path, large batch (gridded, batch-parallel kernel) -------------
    big_batch = 256
    xb = jax.random.normal(kx2, (big_batch, input_dims), jnp.float32)
    out_b = jax.block_until_ready(fwd(xb, slab))
    ref_b = reference_forward(xb, params)
    assert out_b.shape == (big_batch, output_dims)
    assert jnp.allclose(out_b, ref_b, atol=1e-5, rtol=1e-5), "f32 gridded mismatch"

    # --- optional bf16 compute path (v6e/v7x MXU-friendly), relaxed tolerance
    slab_bf16, meta_bf16 = fold_params(params, compute_dtype=jnp.bfloat16)
    fwd_bf16 = jax.jit(functools.partial(ensemble_forward, meta=meta_bf16))
    out_bf16 = jax.block_until_ready(fwd_bf16(x, slab_bf16))
    assert jnp.allclose(out_bf16, ref, atol=2e-2, rtol=2e-2), "bf16 path mismatch"

    print("KERNEL_OK")
</pallas_src>

<mosaic_0001>
module attributes {stable_mosaic.version = 11 : i64} {
  func.func @kernel(%arg0: memref<8x32xf32, #tpu.memory_space<vmem>>, %arg1: memref<176x128xf32, #tpu.memory_space<vmem>>, %arg2: memref<8x128xf32, #tpu.memory_space<vmem>>) attributes {dimension_semantics = [], scalar_prefetch = 0 : i64, scratch_operands = 0 : i64, tpu.core_type = #tpu.core_type<tc>} {
    %c0 = arith.constant 0 : index
    %c0_0 = arith.constant 0 : index
    %0 = vector.load %arg0[%c0, %c0_0] : memref<8x32xf32, #tpu.memory_space<vmem>>, vector<8x32xf32>
    %c0_1 = arith.constant 0 : index
    %c0_2 = arith.constant 0 : index
    %1 = vector.load %arg1[%c0_1, %c0_2] : memref<176x128xf32, #tpu.memory_space<vmem>>, vector<32x128xf32>
    %cst = arith.constant dense<0.000000e+00> : vector<8x128xf32>
    %2 = tpu.matmul %0, %1, %cst {dimension_numbers = #tpu.dot_dimension_numbers<[1], [0], [0], [1], [0, 0, 1, 1], [], []>} : vector<8x32xf32>, vector<32x128xf32>, vector<8x128xf32> -> vector<8x128xf32>
    %c32 = arith.constant 32 : index
    %c0_3 = arith.constant 0 : index
    %3 = vector.load %arg1[%c32, %c0_3] : memref<176x128xf32, #tpu.memory_space<vmem>>, vector<1x128xf32>
    %4 = vector.broadcast %3 : vector<1x128xf32> to vector<8x128xf32>
    %5 = arith.addf %2, %4 : vector<8x128xf32>
    %cst_4 = arith.constant 0.000000e+00 : f32
    %6 = vector.broadcast %cst_4 : f32 to vector<8x128xf32>
    %7 = arith.maximumf %5, %6 : vector<8x128xf32>
    %c40 = arith.constant 40 : index
    %c0_5 = arith.constant 0 : index
    %8 = vector.load %arg1[%c40, %c0_5] : memref<176x128xf32, #tpu.memory_space<vmem>>, vector<128x128xf32>
    %cst_6 = arith.constant dense<0.000000e+00> : vector<8x128xf32>
    %9 = tpu.matmul %7, %8, %cst_6 {dimension_numbers = #tpu.dot_dimension_numbers<[1], [0], [0], [1], [0, 0, 1, 1], [], []>} : vector<8x128xf32>, vector<128x128xf32>, vector<8x128xf32> -> vector<8x128xf32>
    %c168 = arith.constant 168 : index
    %c0_7 = arith.constant 0 : index
    %10 = vector.load %arg1[%c168, %c0_7] : memref<176x128xf32, #tpu.memory_space<vmem>>, vector<1x128xf32>
    %11 = vector.broadcast %10 : vector<1x128xf32> to vector<8x128xf32>
    %12 = arith.addf %9, %11 : vector<8x128xf32>
    %c0_8 = arith.constant 0 : index
    %c0_9 = arith.constant 0 : index
    %13 = vector.load %arg2[%c0_8, %c0_9] : memref<8x128xf32, #tpu.memory_space<vmem>>, vector<8x128xf32>
    tpu.vector_store %arg2[%c0_8, %c0_9], %12 {strides = array<i32>} : memref<8x128xf32, #tpu.memory_space<vmem>>, vector<8x128xf32>,
    return
  }
}

</mosaic_0001>

<llo_original>
// kernel: ensemble_forward.1
$region0: #{ensemble_forward.1}
  #allocation0 [shape = 'u32[]', space=smem, size = 0x4, offset = 0x4, fixed_abs, tag = 'smem constant byte address 0x4 - core index']
  #allocation1 [shape = 'u32[144,128]{1,0:T(1,128)}', space=vmem, size = 0x12000, scoped, tag = 'internal scratch']
  %s0 = inlined_call_operand.hbm [shape: f32[8,32], index: 0, kind: input, shape index: {}]
  %s1 = inlined_call_operand.hbm [shape: f32[176,128], index: 1, kind: input, shape index: {}]
  %s2 = inlined_call_operand.vmem [shape: f32[8,128], index: 2, kind: output, shape index: {}]
  %s3 = sld [smem:[#allocation0]]
  $region26: #{ensemble_forward.1} parent=0
    _
  %s5 = ssub.s32 1, %s3
  %s6 = scalar_select 0, %s5, %s3
  $region1: #{ensemble_forward.1} parent=0
    #allocation2 [shape = 'u8[4096]{0}', space=vmem, size = 0x1000, scoped, tag = 'input window, operand 0, single buffered']
    #allocation3 [shape = 's32[1]{0}', space=sflag, size = 0x4, scoped, tag = 'scoped memory for ensemble_forward.1']
    #allocation4 [shape = 'u8[90112]{0}', space=vmem, size = 0x16000, scoped, tag = 'input window, operand 1, single buffered']
    #allocation5 [shape = 's32[1]{0}', space=sflag, size = 0x4, scoped, tag = 'scoped memory for ensemble_forward.1']
    %7 = vsyncpa [#allocation3], 0
    %8 = vsyncpa [#allocation5], 0
    // Predicated region
    $region2: #{ensemble_forward.1} parent=1 // pred_check
      _
    $region3: #{ensemble_forward.1} parent=1 // pred_check_branch
      %10 = sbr.rel (0) target = $region5
    $region4: #{ensemble_forward.1} parent=1 // pred_region
      %s12 = ssub.s32 128, 128
      %13 = vsyncadd [#allocation3], %s12
      %s15 = sshll.u32 [#allocation2], 4
      %s16 = int_to_ptr.vmem [resolvable:$true] %s15
      %18 = dma.hbm_to_vmem [thread:$0]  %s0, 128, %s16, [#allocation3]
    $region5: #{ensemble_forward.1} parent=1 // pred_fallthru
      _
    // Predicated region
    $region6: #{ensemble_forward.1} parent=1 // pred_check
      _
    $region7: #{ensemble_forward.1} parent=1 // pred_check_branch
      %20 = sbr.rel (0) target = $region9
    $region8: #{ensemble_forward.1} parent=1 // pred_region
      %s22 = ssub.s32 2816, 2816
      %23 = vsyncadd [#allocation5], %s22
      %s24 = sshll.u32 [#allocation4], 4
      %s25 = int_to_ptr.vmem [resolvable:$true] %s24
      %30 = dma.hbm_to_vmem [thread:$0]  %s1, 2816, %s25, [#allocation5], 128, 128, 8
    $region9: #{ensemble_forward.1} parent=1 // pred_fallthru
      _
    // Predicated region
    $region10: #{ensemble_forward.1} parent=1 // pred_check
      _
    $region11: #{ensemble_forward.1} parent=1 // pred_check_branch
      %32 = sbr.rel (0) target = $region13
    $region12: #{ensemble_forward.1} parent=1 // pred_region
      %33 = dma.done [#allocation3], 128
    $region13: #{ensemble_forward.1} parent=1 // pred_fallthru
      _
    // Predicated region
    $region14: #{ensemble_forward.1} parent=1 // pred_check
      _
    $region15: #{ensemble_forward.1} parent=1 // pred_check_branch
      %35 = sbr.rel (0) target = $region17
    $region16: #{ensemble_forward.1} parent=1 // pred_region
      %36 = dma.done [#allocation5], 2816
    $region17: #{ensemble_forward.1} parent=1 // pred_fallthru
      _
    %v37 = vld [vmem:[#allocation2] sm:$0xff]
    %v38 = vld [vmem:[#allocation4] sm:$0xff]
    %v39 = vld [vmem:[#allocation4 + $0x8] sm:$0xff]
    %v40 = vld [vmem:[#allocation4 + $0x10] sm:$0xff]
    %v41 = vld [vmem:[#allocation4 + $0x18] sm:$0xff]
    %v42 = vld [vmem:[#allocation4 + $0x20] sm:$0x1]
    %v43 = vlaneseq
    %v44 = vshrl.u32 %v43, 7
    %v45 = vsub.s32 0, %v44
    %v46 = vrot.slane %v42, %v45
    %vm47 = vcmask 261120
    %v49 = vsel %vm47, %v37, 0
    %51 = vmatprep.subr.mxu0 0.0
    %52 = vmatpush1.msra.mxu0 %v38
    %53 = vmatprep.subr.mxu0 0.0
    %54 = vmatpush1.msra.mxu0 %v39
    %55 = vmatprep.subr.mxu0 0.0
    %56 = vmatpush1.msra.mxu0 %v40
    %57 = vmatprep.subr.mxu0 0.0
    %58 = vmatpush1.msra.mxu0 %v41
    %59 = vmatprep.subr.mxu0 0.0
    %60 = vmatpush1.msra.mxu0 0.0
    %61 = vmatprep.subr.mxu0 0.0
    %62 = vmatpush1.msra.mxu0 0.0
    %63 = vmatprep.subr.mxu0 0.0
    %64 = vmatpush1.msra.mxu0 0.0
    %65 = vmatprep.subr.mxu0 0.0
    %66 = vmatpush1.msra.mxu0 0.0
    %67 = vmatprep.subr.mxu0 0.0
    %68 = vmatpush1.msra.mxu0 0.0
    %69 = vmatprep.subr.mxu0 0.0
    %70 = vmatpush1.msra.mxu0 0.0
    %71 = vmatprep.subr.mxu0 0.0
    %72 = vmatpush1.msra.mxu0 0.0
    %73 = vmatprep.subr.mxu0 0.0
    %74 = vmatpush1.msra.mxu0 0.0
    %75 = vmatprep.subr.mxu0 0.0
    %76 = vmatpush1.msra.mxu0 0.0
    %77 = vmatprep.subr.mxu0 0.0
    %78 = vmatpush1.msra.mxu0 0.0
    %79 = vmatprep.subr.mxu0 0.0
    %80 = vmatpush1.msra.mxu0 0.0
    %81 = vmatprep.subr.mxu0 0.0
    %82 = vmatpush1.msra.mxu0 0.0
    %83 = vmatprep.subr.mxu0 0.0
    %84 = vmatpush1.msra.mxu0 0.0
    %85 = vmatprep.subr.mxu0 0.0
    %86 = vmatpush1.msra.mxu0 0.0
    %87 = vmatprep.subr.mxu0 0.0
    %88 = vmatpush1.msra.mxu0 0.0
    %89 = vmatprep.subr.mxu0 0.0
    %90 = vmatpush1.msra.mxu0 0.0
    %91 = vmatprep.subr.mxu0 0.0
    %92 = vmatpush1.msra.mxu0 0.0
    %93 = vmatprep.subr.mxu0 0.0
    %94 = vmatpush1.msra.mxu0 0.0
    %95 = vmatprep.subr.mxu0 0.0
    %96 = vmatpush1.msra.mxu0 0.0
    %97 = vmatprep.subr.mxu0 0.0
    %98 = vmatpush1.msra.mxu0 0.0
    %99 = vmatprep.subr.mxu0 0.0
    %100 = vmatpush1.msra.mxu0 0.0
    %101 = vmatprep.subr.mxu0 0.0
    %102 = vmatpush1.msra.mxu0 0.0
    %103 = vmatprep.subr.mxu0 0.0
    %104 = vmatpush1.msra.mxu0 0.0
    %105 = vmatprep.subr.mxu0 0.0
    %106 = vmatpush1.msra.mxu0 0.0
    %107 = vmatprep.subr.mxu0 0.0
    %108 = vmatpush1.msra.mxu0 0.0
    %109 = vmatprep.subr.mxu0 0.0
    %110 = vmatpush1.msra.mxu0 0.0
    %111 = vmatprep.subr.mxu0 0.0
    %112 = vmatpush1.msra.mxu0 0.0
    %113 = vmatprep.subr.mxu0 0.0
    %114 = vmatpush1.msra.mxu0 0.0
    %115 = vmatprep.mubr.f32.mxu0 0.0
    %116 = vmatmul.mubr.f32.gmra.mrb[0].mxu0 %v49
    %v117 = vpop.f32.mrb[0].mxu0
    %v118 = vadd.f32 %v46, %v117
    %v119 = vpop.f32.mrb[0].mxu0
    %120 = vdwg.mxu0
    %v121 = vmax.f32 %v118, 0.0
    %v122 = vld [vmem:[#allocation4 + $0x28] sm:$0xff]
    %v123 = vld [vmem:[#allocation4 + $0x30] sm:$0xff]
    %v124 = vld [vmem:[#allocation4 + $0x38] sm:$0xff]
    %v125 = vld [vmem:[#allocation4 + $0x40] sm:$0xff]
    %v126 = vld [vmem:[#allocation4 + $0x48] sm:$0xff]
    %v127 = vld [vmem:[#allocation4 + $0x50] sm:$0xff]
    %v128 = vld [vmem:[#allocation4 + $0x58] sm:$0xff]
    %v129 = vld [vmem:[#allocation4 + $0x60] sm:$0xff]
    %v130 = vld [vmem:[#allocation4 + $0x68] sm:$0xff]
    %v131 = vld [vmem:[#allocation4 + $0x70] sm:$0xff]
    %v132 = vld [vmem:[#allocation4 + $0x78] sm:$0xff]
    %v133 = vld [vmem:[#allocation4 + $0x80] sm:$0xff]
    %v134 = vld [vmem:[#allocation4 + $0x88] sm:$0xff]
    %v135 = vld [vmem:[#allocation4 + $0x90] sm:$0xff]
    %v136 = vld [vmem:[#allocation4 + $0x98] sm:$0xff]
    %v137 = vld [vmem:[#allocation4 + $0xa0] sm:$0xff]
    %v138 = vld [vmem:[#allocation4 + $0xa8] sm:$0x1]
    %v139 = vlaneseq
    %v140 = vshrl.u32 %v139, 7
    %v141 = vsub.s32 0, %v140
    %v142 = vrot.slane %v138, %v141
    %143 = vmatprep.subr.mxu0 0.0
    %144 = vmatpush1.msra.mxu0 %v122
    %145 = vmatprep.subr.mxu0 0.0
    %146 = vmatpush1.msra.mxu0 %v123
    %147 = vmatprep.subr.mxu0 0.0
    %148 = vmatpush1.msra.mxu0 %v124
    %149 = vmatprep.subr.mxu0 0.0
    %150 = vmatpush1.msra.mxu0 %v125
    %151 = vmatprep.subr.mxu0 0.0
    %152 = vmatpush1.msra.mxu0 %v126
    %153 = vmatprep.subr.mxu0 0.0
    %154 = vmatpush1.msra.mxu0 %v127
    %155 = vmatprep.subr.mxu0 0.0
    %156 = vmatpush1.msra.mxu0 %v128
    %157 = vmatprep.subr.mxu0 0.0
    %158 = vmatpush1.msra.mxu0 %v129
    %159 = vmatprep.subr.mxu0 0.0
    %160 = vmatpush1.msra.mxu0 %v130
    %161 = vmatprep.subr.mxu0 0.0
    %162 = vmatpush1.msra.mxu0 %v131
    %163 = vmatprep.subr.mxu0 0.0
    %164 = vmatpush1.msra.mxu0 %v132
    %165 = vmatprep.subr.mxu0 0.0
    %166 = vmatpush1.msra.mxu0 %v133
    %167 = vmatprep.subr.mxu0 0.0
    %168 = vmatpush1.msra.mxu0 %v134
    %169 = vmatprep.subr.mxu0 0.0
    %170 = vmatpush1.msra.mxu0 %v135
    %171 = vmatprep.subr.mxu0 0.0
    %172 = vmatpush1.msra.mxu0 %v136
    %173 = vmatprep.subr.mxu0 0.0
    %174 = vmatpush1.msra.mxu0 %v137
    %175 = vmatprep.subr.mxu0 0.0
    %176 = vmatpush1.msra.mxu0 0.0
    %177 = vmatprep.subr.mxu0 0.0
    %178 = vmatpush1.msra.mxu0 0.0
    %179 = vmatprep.subr.mxu0 0.0
    %180 = vmatpush1.msra.mxu0 0.0
    %181 = vmatprep.subr.mxu0 0.0
    %182 = vmatpush1.msra.mxu0 0.0
    %183 = vmatprep.subr.mxu0 0.0
    %184 = vmatpush1.msra.mxu0 0.0
    %185 = vmatprep.subr.mxu0 0.0
    %186 = vmatpush1.msra.mxu0 0.0
    %187 = vmatprep.subr.mxu0 0.0
    %188 = vmatpush1.msra.mxu0 0.0
    %189 = vmatprep.subr.mxu0 0.0
    %190 = vmatpush1.msra.mxu0 0.0
    %191 = vmatprep.subr.mxu0 0.0
    %192 = vmatpush1.msra.mxu0 0.0
    %193 = vmatprep.subr.mxu0 0.0
    %194 = vmatpush1.msra.mxu0 0.0
    %195 = vmatprep.subr.mxu0 0.0
    %196 = vmatpush1.msra.mxu0 0.0
    %197 = vmatprep.subr.mxu0 0.0
    %198 = vmatpush1.msra.mxu0 0.0
    %199 = vmatprep.subr.mxu0 0.0
    %200 = vmatpush1.msra.mxu0 0.0
    %201 = vmatprep.subr.mxu0 0.0
    %202 = vmatpush1.msra.mxu0 0.0
    %203 = vmatprep.subr.mxu0 0.0
    %204 = vmatpush1.msra.mxu0 0.0
    %205 = vmatprep.subr.mxu0 0.0
    %206 = vmatpush1.msra.mxu0 0.0
    %207 = vmatprep.mubr.f32.mxu0 0.0
    %208 = vmatmul.mubr.f32.gmra.mrb[0].mxu0 %v121
    %v209 = vpop.f32.mrb[0].mxu0
    %v210 = vadd.f32 %v142, %v209
    %v211 = vpop.f32.mrb[0].mxu0
    %212 = vdwg.mxu0
    %213 = vst [vmem:[%s2] sm:$0xff] %v210
    // Predicated region
    $region18: #{ensemble_forward.1} parent=1 // pred_check
      _
    $region19: #{ensemble_forward.1} parent=1 // pred_check_branch
      %215 = sbr.rel (0) target = $region21
    $region20: #{ensemble_forward.1} parent=1 // pred_region
      _
    $region21: #{ensemble_forward.1} parent=1 // pred_fallthru
      _
    // Predicated region
    $region22: #{ensemble_forward.1} parent=1 // pred_check
      _
    $region23: #{ensemble_forward.1} parent=1 // pred_check_branch
      %217 = sbr.rel (0) target = $region25
    $region24: #{ensemble_forward.1} parent=1 // pred_region
      _
    $region25: #{ensemble_forward.1} parent=1 // pred_fallthru
      _
    %218 = vsyncpa [#allocation3], 1
    %219 = vsyncpa [#allocation5], 1

</llo_original>
